<compile_context>
chip_gen: v7x
topology: tpu7x:2x2x1
jax: 0.10.0
libtpu: 0.0.40
codegen_flags: <defaults>
</compile_context>

<pallas_src>
import jax
import jax.numpy as jnp
from jax.experimental import pallas as pl
from jax.experimental.pallas import tpu as pltpu

STATE_DIM = 4
N_ACTIONS = 2
H1, H2 = 64, 32

# ---- packed parameter slab layout (rows of a (104, 64) f32 slab) ------------
_W1_R = 0      # rows  0:4   cols 0:64  -> w1 (4, 64)
_B1_R = 8      # row   8     cols 0:64  -> b1 (64,)
_W2_R = 16     # rows 16:80  cols 0:32  -> w2 (64, 32)
_B2_R = 80     # row  80     cols 0:32  -> b2 (32,)
_W3_R = 88     # rows 88:90  cols 0:32  -> w3^T (2, 32) (row a = weights of action a)
_B3_R = 96     # row  96     cols 0:2   -> b3 (2,)
_SLAB_ROWS = 104
_SLAB_COLS = 64


def actor_kernel(x_ref, p_ref, o_ref):
    x = x_ref[...]                                        # (TB, 4) f32

    # ---- Layer 1: (TB,4) @ (4,64) as 4 broadcast FMAs on the VPU ----
    h1 = p_ref[_B1_R:_B1_R + 1, :]                        # (1, 64) bias
    for k in range(STATE_DIM):
        h1 = h1 + x[:, k:k + 1] * p_ref[_W1_R + k:_W1_R + k + 1, :]
    h1 = jnp.tanh(h1)                                     # (TB, 64)

    # ---- Layer 2: (TB,64) @ (64,32) on the MXU ----
    w2 = p_ref[_W2_R:_W2_R + H1, 0:H2]                    # (64, 32)
    b2 = p_ref[_B2_R:_B2_R + 1, 0:H2]                     # (1, 32)
    h2 = jnp.tanh(jnp.dot(h1, w2, preferred_element_type=jnp.float32) + b2)

    # ---- Layer 3: (TB,32) @ (32,2) as per-action multiply + lane reduce ----
    cols = []
    for a in range(N_ACTIONS):
        w3a = p_ref[_W3_R + a:_W3_R + a + 1, 0:H2]        # (1, 32)
        b3a = p_ref[_B3_R:_B3_R + 1, a:a + 1]             # (1, 1)
        cols.append(jnp.sum(h2 * w3a, axis=-1, keepdims=True) + b3a)  # (TB, 1)
    logits = jnp.concatenate(cols, axis=-1)               # (TB, 2)

    # ---- Softmax over actions; one full-tile store ----
    m = jnp.max(logits, axis=-1, keepdims=True)
    e = jnp.exp(logits - m)
    probs = e / jnp.sum(e, axis=-1, keepdims=True)
    o_ref[...] = probs.astype(o_ref.dtype)


def pack_params(params):
    """Pack (w1,b1,w2,b2,w3,b3) into a single (104, 64) f32 slab (one DMA)."""
    w1, b1, w2, b2, w3, b3 = params
    slab = jnp.zeros((_SLAB_ROWS, _SLAB_COLS), jnp.float32)
    slab = slab.at[_W1_R:_W1_R + STATE_DIM, 0:H1].set(w1)
    slab = slab.at[_B1_R, 0:H1].set(b1.reshape(H1))
    slab = slab.at[_W2_R:_W2_R + H1, 0:H2].set(w2)
    slab = slab.at[_B2_R, 0:H2].set(b2.reshape(H2))
    slab = slab.at[_W3_R:_W3_R + N_ACTIONS, 0:H2].set(w3.T)
    slab = slab.at[_B3_R, 0:N_ACTIONS].set(b3.reshape(N_ACTIONS))
    return slab


def actor_forward(x, slab, *, tb=None):
    batch = x.shape[0]
    if tb is None:
        # Small batches: one full-array block. Large batches: 512-row tiles
        # (well inside the 32 MiB scoped-VMEM default on every chip).
        tb = batch if batch <= 512 else 512
    grid = (pl.cdiv(batch, tb),)
    return pl.pallas_call(
        actor_kernel,
        out_shape=jax.ShapeDtypeStruct((batch, N_ACTIONS), jnp.float32),
        grid_spec=pltpu.PrefetchScalarGridSpec(
            num_scalar_prefetch=0,
            grid=grid,
            in_specs=[
                pl.BlockSpec((tb, STATE_DIM), lambda i: (i, 0)),
                # constant block index -> slab stays VMEM-resident across grid
                pl.BlockSpec((_SLAB_ROWS, _SLAB_COLS), lambda i: (0, 0)),
            ],
            out_specs=pl.BlockSpec((tb, N_ACTIONS), lambda i: (i, 0)),
        ),
        compiler_params=pltpu.CompilerParams(
            dimension_semantics=("parallel",)),
    )(x, slab)


def init_params(key, state_dim, n_actions):
    # PyTorch-style uniform(-1/sqrt(fan_in), 1/sqrt(fan_in)) init, deterministic.
    def linear(key, fan_in, fan_out):
        kw, kb = jax.random.split(key)
        bound = 1.0 / jnp.sqrt(jnp.float32(fan_in))
        # stored as (in_features, out_features) so the math is X @ W + b
        w = jax.random.uniform(kw, (fan_in, fan_out), jnp.float32, -bound, bound)
        b = jax.random.uniform(kb, (fan_out,), jnp.float32, -bound, bound)
        return w, b

    k1, k2, k3 = jax.random.split(key, 3)
    w1, b1 = linear(k1, state_dim, H1)
    w2, b2 = linear(k2, H1, H2)
    w3, b3 = linear(k3, H2, n_actions)
    return (w1, b1, w2, b2, w3, b3)


def actor_reference(x, params):
    w1, b1, w2, b2, w3, b3 = params
    h1 = jnp.tanh(x @ w1 + b1)
    h2 = jnp.tanh(h1 @ w2 + b2)
    logits = h2 @ w3 + b3
    return jax.nn.softmax(logits, axis=-1)


if __name__ == "__main__":
    key = jax.random.PRNGKey(0)
    kx, kp = jax.random.split(key)

    state_dim = 4   # CartPole-v1 observation space
    n_actions = 2   # CartPole-v1 action space
    batch = 8

    x = jax.random.normal(kx, (batch, state_dim), dtype=jnp.float32)
    params = init_params(kp, state_dim, n_actions)
    slab = pack_params(params)

    out = actor_forward(x, slab)
    out = jax.block_until_ready(out)

    ref = actor_reference(x, params)
    assert out.shape == (batch, n_actions)
    assert jnp.allclose(out, ref, atol=1e-5, rtol=1e-5)
    # probabilities sum to 1
    assert jnp.allclose(jnp.sum(out, axis=-1), jnp.ones((batch,)), atol=1e-5)

    print("KERNEL_OK")
</pallas_src>

<mosaic_0001>
module attributes {stable_mosaic.version = 11 : i64} {
  func.func @actor_kernel(%arg0: i32, %arg1: memref<8x4xf32, #tpu.memory_space<vmem>>, %arg2: memref<104x64xf32, #tpu.memory_space<vmem>>, %arg3: memref<8x2xf32, #tpu.memory_space<vmem>>) attributes {dimension_semantics = [#tpu.dimension_semantics<parallel>], iteration_bounds = array<i64: 1>, scalar_prefetch = 0 : i64, scratch_operands = 0 : i64, tpu.core_type = #tpu.core_type<tc>, window_params = [{transform_indices = @transform_0, window_bounds = array<i64: 8, 4>}, {pipeline_mode = #tpu.pipeline_mode<synchronous>, transform_indices = @transform_1, window_bounds = array<i64: 104, 64>}, {transform_indices = @transform_2, window_bounds = array<i64: 8, 2>}]} {
    %c0 = arith.constant 0 : index
    %c0_0 = arith.constant 0 : index
    %0 = vector.load %arg1[%c0, %c0_0] : memref<8x4xf32, #tpu.memory_space<vmem>>, vector<8x4xf32>
    %c8 = arith.constant 8 : index
    %c0_1 = arith.constant 0 : index
    %1 = vector.load %arg2[%c8, %c0_1] : memref<104x64xf32, #tpu.memory_space<vmem>>, vector<1x64xf32>
    %2 = vector.extract_strided_slice %0 {offsets = [0, 0], sizes = [8, 1], strides = [1, 1]} : vector<8x4xf32> to vector<8x1xf32>
    %c0_2 = arith.constant 0 : index
    %c0_3 = arith.constant 0 : index
    %3 = vector.load %arg2[%c0_2, %c0_3] : memref<104x64xf32, #tpu.memory_space<vmem>>, vector<1x64xf32>
    %4 = vector.broadcast %2 : vector<8x1xf32> to vector<8x64xf32>
    %5 = vector.broadcast %3 : vector<1x64xf32> to vector<8x64xf32>
    %6 = arith.mulf %4, %5 : vector<8x64xf32>
    %7 = vector.broadcast %1 : vector<1x64xf32> to vector<8x64xf32>
    %8 = arith.addf %7, %6 : vector<8x64xf32>
    %9 = vector.extract_strided_slice %0 {offsets = [0, 1], sizes = [8, 1], strides = [1, 1]} : vector<8x4xf32> to vector<8x1xf32>
    %c1 = arith.constant 1 : index
    %c0_4 = arith.constant 0 : index
    %10 = vector.load %arg2[%c1, %c0_4] : memref<104x64xf32, #tpu.memory_space<vmem>>, vector<1x64xf32>
    %11 = vector.broadcast %9 : vector<8x1xf32> to vector<8x64xf32>
    %12 = vector.broadcast %10 : vector<1x64xf32> to vector<8x64xf32>
    %13 = arith.mulf %11, %12 : vector<8x64xf32>
    %14 = arith.addf %8, %13 : vector<8x64xf32>
    %15 = vector.extract_strided_slice %0 {offsets = [0, 2], sizes = [8, 1], strides = [1, 1]} : vector<8x4xf32> to vector<8x1xf32>
    %c2 = arith.constant 2 : index
    %c0_5 = arith.constant 0 : index
    %16 = vector.load %arg2[%c2, %c0_5] : memref<104x64xf32, #tpu.memory_space<vmem>>, vector<1x64xf32>
    %17 = vector.broadcast %15 : vector<8x1xf32> to vector<8x64xf32>
    %18 = vector.broadcast %16 : vector<1x64xf32> to vector<8x64xf32>
    %19 = arith.mulf %17, %18 : vector<8x64xf32>
    %20 = arith.addf %14, %19 : vector<8x64xf32>
    %21 = vector.extract_strided_slice %0 {offsets = [0, 3], sizes = [8, 1], strides = [1, 1]} : vector<8x4xf32> to vector<8x1xf32>
    %c3 = arith.constant 3 : index
    %c0_6 = arith.constant 0 : index
    %22 = vector.load %arg2[%c3, %c0_6] : memref<104x64xf32, #tpu.memory_space<vmem>>, vector<1x64xf32>
    %23 = vector.broadcast %21 : vector<8x1xf32> to vector<8x64xf32>
    %24 = vector.broadcast %22 : vector<1x64xf32> to vector<8x64xf32>
    %25 = arith.mulf %23, %24 : vector<8x64xf32>
    %26 = arith.addf %20, %25 : vector<8x64xf32>
    %27 = math.tanh %26 : vector<8x64xf32>
    %c16 = arith.constant 16 : index
    %c0_7 = arith.constant 0 : index
    %28 = vector.load %arg2[%c16, %c0_7] : memref<104x64xf32, #tpu.memory_space<vmem>>, vector<64x32xf32>
    %c80 = arith.constant 80 : index
    %c0_8 = arith.constant 0 : index
    %29 = vector.load %arg2[%c80, %c0_8] : memref<104x64xf32, #tpu.memory_space<vmem>>, vector<1x32xf32>
    %cst = arith.constant dense<0.000000e+00> : vector<8x32xf32>
    %30 = tpu.matmul %27, %28, %cst {dimension_numbers = #tpu.dot_dimension_numbers<[1], [0], [0], [1], [0, 0, 1, 1], [], []>} : vector<8x64xf32>, vector<64x32xf32>, vector<8x32xf32> -> vector<8x32xf32>
    %31 = vector.broadcast %29 : vector<1x32xf32> to vector<8x32xf32>
    %32 = arith.addf %30, %31 : vector<8x32xf32>
    %33 = math.tanh %32 : vector<8x32xf32>
    %c88 = arith.constant 88 : index
    %c0_9 = arith.constant 0 : index
    %34 = vector.load %arg2[%c88, %c0_9] : memref<104x64xf32, #tpu.memory_space<vmem>>, vector<1x32xf32>
    %c96 = arith.constant 96 : index
    %c0_10 = arith.constant 0 : index
    %35 = vector.load %arg2[%c96, %c0_10] : memref<104x64xf32, #tpu.memory_space<vmem>>, vector<1x1xf32>
    %36 = vector.broadcast %34 : vector<1x32xf32> to vector<8x32xf32>
    %37 = arith.mulf %33, %36 : vector<8x32xf32>
    %cst_11 = arith.constant dense<0.000000e+00> : vector<8xf32>
    %38 = vector.multi_reduction <add>, %37, %cst_11 [1] : vector<8x32xf32> to vector<8xf32>
    %39 = vector.shape_cast %38 : vector<8xf32> to vector<8x1xf32>
    %40 = vector.broadcast %35 : vector<1x1xf32> to vector<8x1xf32>
    %41 = arith.addf %39, %40 : vector<8x1xf32>
    %c89 = arith.constant 89 : index
    %c0_12 = arith.constant 0 : index
    %42 = vector.load %arg2[%c89, %c0_12] : memref<104x64xf32, #tpu.memory_space<vmem>>, vector<1x32xf32>
    %c96_13 = arith.constant 96 : index
    %c1_14 = arith.constant 1 : index
    %43 = vector.load %arg2[%c96_13, %c1_14] : memref<104x64xf32, #tpu.memory_space<vmem>>, vector<1x1xf32>
    %44 = vector.broadcast %42 : vector<1x32xf32> to vector<8x32xf32>
    %45 = arith.mulf %33, %44 : vector<8x32xf32>
    %cst_15 = arith.constant dense<0.000000e+00> : vector<8xf32>
    %46 = vector.multi_reduction <add>, %45, %cst_15 [1] : vector<8x32xf32> to vector<8xf32>
    %47 = vector.shape_cast %46 : vector<8xf32> to vector<8x1xf32>
    %48 = vector.broadcast %43 : vector<1x1xf32> to vector<8x1xf32>
    %49 = arith.addf %47, %48 : vector<8x1xf32>
    %50 = tpu.concatenate %41, %49 in 1 : vector<8x1xf32>, vector<8x1xf32> -> vector<8x2xf32>
    %cst_16 = arith.constant dense<0xFF800000> : vector<8xf32>
    %51 = vector.multi_reduction <maximumf>, %50, %cst_16 [1] : vector<8x2xf32> to vector<8xf32>
    %52 = vector.shape_cast %51 : vector<8xf32> to vector<8x1xf32>
    %53 = vector.broadcast %52 : vector<8x1xf32> to vector<8x2xf32>
    %54 = arith.subf %50, %53 : vector<8x2xf32>
    %55 = math.exp %54 : vector<8x2xf32>
    %cst_17 = arith.constant dense<0.000000e+00> : vector<8xf32>
    %56 = vector.multi_reduction <add>, %55, %cst_17 [1] : vector<8x2xf32> to vector<8xf32>
    %57 = vector.shape_cast %56 : vector<8xf32> to vector<8x1xf32>
    %58 = vector.broadcast %57 : vector<8x1xf32> to vector<8x2xf32>
    %59 = arith.divf %55, %58 : vector<8x2xf32>
    %c0_18 = arith.constant 0 : index
    %c0_19 = arith.constant 0 : index
    %60 = vector.load %arg3[%c0_18, %c0_19] : memref<8x2xf32, #tpu.memory_space<vmem>>, vector<8x2xf32>
    tpu.vector_store %arg3[%c0_18, %c0_19], %59 {strides = array<i32>} : memref<8x2xf32, #tpu.memory_space<vmem>>, vector<8x2xf32>,
    return
  }
  func.func @transform_0(%arg0: i32) -> (i32, i32) {
    %c0_i32 = arith.constant 0 : i32
    %c0_i32_0 = arith.constant 0 : i32
    return %arg0, %c0_i32 : i32, i32
  }
  func.func @transform_1(%arg0: i32) -> (i32, i32) {
    %c0_i32 = arith.constant 0 : i32
    %c0_i32_0 = arith.constant 0 : i32
    %c0_i32_1 = arith.constant 0 : i32
    return %c0_i32, %c0_i32_0 : i32, i32
  }
  func.func @transform_2(%arg0: i32) -> (i32, i32) {
    %c0_i32 = arith.constant 0 : i32
    %c0_i32_0 = arith.constant 0 : i32
    return %arg0, %c0_i32 : i32, i32
  }
}

</mosaic_0001>

<llo_original>
// kernel: tpu_custom_call.1
$region0: #{tpu_custom_call.1}
  #allocation0 [shape = 'u32[]', space=smem, size = 0x4, offset = 0x4, fixed_abs, tag = 'smem constant byte address 0x4 - core index']
  #allocation1 [shape = 'u32[144,128]{1,0:T(1,128)}', space=vmem, size = 0x12000, scoped, tag = 'internal scratch']
  %s0 = inlined_call_operand.vmem [shape: f32[8,4], index: 0, kind: input, shape index: {}]
  %s1 = inlined_call_operand.vmem [shape: f32[104,64], index: 1, kind: input, shape index: {}]
  %s2 = inlined_call_operand.vmem [shape: f32[8,2], index: 2, kind: output, shape index: {}]
  %s3 = sld [smem:[#allocation0]]
  $region18: #{tpu_custom_call.1} parent=0
    _
  %s5 = ssub.s32 1, %s3
  %s6 = scalar_select 0, %s5, %s3
  // Predicated region
  $region2: #{tpu_custom_call.1} parent=0 // pred_check
    _
  $region3: #{tpu_custom_call.1} parent=0 // pred_check_branch
    %8 = sbr.rel (0) target = $region5
  $region4: #{tpu_custom_call.1} parent=0 // pred_region
    _
  $region5: #{tpu_custom_call.1} parent=0 // pred_fallthru
    _
  // Predicated region
  $region6: #{tpu_custom_call.1} parent=0 // pred_check
    _
  $region7: #{tpu_custom_call.1} parent=0 // pred_check_branch
    %10 = sbr.rel (0) target = $region9
  $region8: #{tpu_custom_call.1} parent=0 // pred_region
    _
  $region9: #{tpu_custom_call.1} parent=0 // pred_fallthru
    _
  %v11 = vld [vmem:[%s0] sm:$0xff]
  %v12 = vld [vmem:[%s1 + $0x8] sm:$0x1]
  %v13 = vld [vmem:[%s1] sm:$0x1]
  %15 = vset.pattern.permute.xlu0 0
  %16 = vperm.xlu0 %15, %v11
  %v17 = vpop.permute.xlu0 %16
  %v19 = vlaneseq
  %v20 = vshrl.u32 %v19, 7
  %v21 = vsub.s32 0, %v20
  %v22 = vrot.slane %v13, %v21
  %v23 = vmul.f32 %v17, %v22
  %v24 = vlaneseq
  %v25 = vshrl.u32 %v24, 7
  %v26 = vsub.s32 0, %v25
  %v27 = vrot.slane %v12, %v26
  %v28 = vadd.f32 %v27, %v23
  %v29 = vld [vmem:[%s1 + $0x1] sm:$0x1]
  %30 = vset.pattern.permute.xlu0 1
  %31 = vperm.xlu0 %30, %v11
  %v32 = vpop.permute.xlu0 %31
  %v34 = vlaneseq
  %v35 = vshrl.u32 %v34, 7
  %v36 = vsub.s32 0, %v35
  %v37 = vrot.slane %v29, %v36
  %v38 = vmul.f32 %v32, %v37
  %v39 = vadd.f32 %v28, %v38
  %v40 = vld [vmem:[%s1 + $0x2] sm:$0x1]
  %41 = vset.pattern.permute.xlu0 2
  %42 = vperm.xlu0 %41, %v11
  %v43 = vpop.permute.xlu0 %42
  %v45 = vlaneseq
  %v46 = vshrl.u32 %v45, 7
  %v47 = vsub.s32 0, %v46
  %v48 = vrot.slane %v40, %v47
  %v49 = vmul.f32 %v43, %v48
  %v50 = vadd.f32 %v39, %v49
  %v51 = vld [vmem:[%s1 + $0x3] sm:$0x1]
  %52 = vset.pattern.permute.xlu0 3
  %53 = vperm.xlu0 %52, %v11
  %v54 = vpop.permute.xlu0 %53
  %v56 = vlaneseq
  %v57 = vshrl.u32 %v56, 7
  %v58 = vsub.s32 0, %v57
  %v59 = vrot.slane %v51, %v58
  %v60 = vmul.f32 %v54, %v59
  %v61 = vadd.f32 %v50, %v60
  %v62 = vtanh.pop %v61
  %v63 = vld [vmem:[%s1 + $0x10] sm:$0xff]
  %v64 = vld [vmem:[%s1 + $0x18] sm:$0xff]
  %v65 = vld [vmem:[%s1 + $0x20] sm:$0xff]
  %v66 = vld [vmem:[%s1 + $0x28] sm:$0xff]
  %v67 = vld [vmem:[%s1 + $0x30] sm:$0xff]
  %v68 = vld [vmem:[%s1 + $0x38] sm:$0xff]
  %v69 = vld [vmem:[%s1 + $0x40] sm:$0xff]
  %v70 = vld [vmem:[%s1 + $0x48] sm:$0xff]
  %v71 = vld [vmem:[%s1 + $0x50] sm:$0x1]
  %v72 = vlaneseq
  %v73 = vshrl.u32 %v72, 7
  %v74 = vsub.s32 0, %v73
  %v75 = vrot.slane %v71, %v74
  %vm76 = vcmask 523264
  %v78 = vsel %vm76, %v62, 0
  %80 = vmatprep.subr.mxu0 0.0
  %81 = vmatpush1.msra.mxu0 %v63
  %82 = vmatprep.subr.mxu0 0.0
  %83 = vmatpush1.msra.mxu0 %v64
  %84 = vmatprep.subr.mxu0 0.0
  %85 = vmatpush1.msra.mxu0 %v65
  %86 = vmatprep.subr.mxu0 0.0
  %87 = vmatpush1.msra.mxu0 %v66
  %88 = vmatprep.subr.mxu0 0.0
  %89 = vmatpush1.msra.mxu0 %v67
  %90 = vmatprep.subr.mxu0 0.0
  %91 = vmatpush1.msra.mxu0 %v68
  %92 = vmatprep.subr.mxu0 0.0
  %93 = vmatpush1.msra.mxu0 %v69
  %94 = vmatprep.subr.mxu0 0.0
  %95 = vmatpush1.msra.mxu0 %v70
  %96 = vmatprep.subr.mxu0 0.0
  %97 = vmatpush1.msra.mxu0 0.0
  %98 = vmatprep.subr.mxu0 0.0
  %99 = vmatpush1.msra.mxu0 0.0
  %100 = vmatprep.subr.mxu0 0.0
  %101 = vmatpush1.msra.mxu0 0.0
  %102 = vmatprep.subr.mxu0 0.0
  %103 = vmatpush1.msra.mxu0 0.0
  %104 = vmatprep.subr.mxu0 0.0
  %105 = vmatpush1.msra.mxu0 0.0
  %106 = vmatprep.subr.mxu0 0.0
  %107 = vmatpush1.msra.mxu0 0.0
  %108 = vmatprep.subr.mxu0 0.0
  %109 = vmatpush1.msra.mxu0 0.0
  %110 = vmatprep.subr.mxu0 0.0
  %111 = vmatpush1.msra.mxu0 0.0
  %112 = vmatprep.subr.mxu0 0.0
  %113 = vmatpush1.msra.mxu0 0.0
  %114 = vmatprep.subr.mxu0 0.0
  %115 = vmatpush1.msra.mxu0 0.0
  %116 = vmatprep.subr.mxu0 0.0
  %117 = vmatpush1.msra.mxu0 0.0
  %118 = vmatprep.subr.mxu0 0.0
  %119 = vmatpush1.msra.mxu0 0.0
  %120 = vmatprep.subr.mxu0 0.0
  %121 = vmatpush1.msra.mxu0 0.0
  %122 = vmatprep.subr.mxu0 0.0
  %123 = vmatpush1.msra.mxu0 0.0
  %124 = vmatprep.subr.mxu0 0.0
  %125 = vmatpush1.msra.mxu0 0.0
  %126 = vmatprep.subr.mxu0 0.0
  %127 = vmatpush1.msra.mxu0 0.0
  %128 = vmatprep.subr.mxu0 0.0
  %129 = vmatpush1.msra.mxu0 0.0
  %130 = vmatprep.subr.mxu0 0.0
  %131 = vmatpush1.msra.mxu0 0.0
  %132 = vmatprep.subr.mxu0 0.0
  %133 = vmatpush1.msra.mxu0 0.0
  %134 = vmatprep.subr.mxu0 0.0
  %135 = vmatpush1.msra.mxu0 0.0
  %136 = vmatprep.subr.mxu0 0.0
  %137 = vmatpush1.msra.mxu0 0.0
  %138 = vmatprep.subr.mxu0 0.0
  %139 = vmatpush1.msra.mxu0 0.0
  %140 = vmatprep.subr.mxu0 0.0
  %141 = vmatpush1.msra.mxu0 0.0
  %142 = vmatprep.subr.mxu0 0.0
  %143 = vmatpush1.msra.mxu0 0.0
  %144 = vmatprep.mubr.f32.mxu0 0.0
  %145 = vmatmul.mubr.f32.gmra.mrb[0].mxu0 %v78
  %v146 = vpop.f32.mrb[0].mxu0
  %v147 = vadd.f32 %v75, %v146
  %v148 = vpop.f32.mrb[0].mxu0
  %149 = vdwg.mxu0
  %v150 = vtanh.pop %v147
  %v151 = vld [vmem:[%s1 + $0x58] sm:$0x1]
  %v152 = vld [vmem:[%s1 + $0x60] sm:$0x1]
  %v153 = vlaneseq
  %v154 = vshrl.u32 %v153, 7
  %v155 = vsub.s32 0, %v154
  %v156 = vrot.slane %v151, %v155
  %v157 = vmul.f32 %v150, %v156
  %vm158 = vcmask 261120
  %v159 = vsel %vm158, %v157, 0.0
  %160 = vadd.xlane.f32.xlu0 %v159
  %v161 = vpop.xlane.xlu0 %160
  %v162 = vlaneseq
  %v163 = vshrl.u32 %v162, 7
  %v164 = vsub.s32 0, %v163
  %v165 = vrot.slane %v152, %v164
  %v166 = vadd.f32 %v161, %v165
  %v167 = vld [vmem:[%s1 + $0x59] sm:$0x1]
  %v168 = vlaneseq
  %v169 = vshrl.u32 %v168, 7
  %v170 = vsub.s32 0, %v169
  %v171 = vrot.slane %v167, %v170
  %v172 = vmul.f32 %v150, %v171
  %v173 = vsel %vm158, %v172, 0.0
  %174 = vadd.xlane.f32.xlu0 %v173
  %v175 = vpop.xlane.xlu0 %174
  %v176 = vadd.f32 %v175, %v165
  %vm177 = vcmask 7168
  %v178 = vsel %vm177, %v166, %v176
  %vm179 = vcmask 15360
  %v180 = vsel %vm179, %v178, -inf
  %181 = vmax.xlane.f32.xlu0 %v180
  %v182 = vpop.xlane.xlu0 %181
  %v183 = vsub.f32 %v178, %v182
  %v184 = vmul.f32 %v183, 1.442695
  %v185 = vpow.pop %v184
  %v186 = vsel %vm179, %v185, 0.0
  %187 = vadd.xlane.f32.xlu0 %v186
  %v188 = vpop.xlane.xlu0 %187
  %v189 = vrcp.pop %v188
  %v190 = vmul.f32 %v185, %v189
  %191 = vst.msk [vmem:[%s2] sm:$0xff] %vm179, %v190
  // Predicated region
  $region10: #{tpu_custom_call.1} parent=0 // pred_check
    _
  $region11: #{tpu_custom_call.1} parent=0 // pred_check_branch
    %193 = sbr.rel (0) target = $region13
  $region12: #{tpu_custom_call.1} parent=0 // pred_region
    _
  $region13: #{tpu_custom_call.1} parent=0 // pred_fallthru
    _
  // Predicated region
  $region14: #{tpu_custom_call.1} parent=0 // pred_check
    _
  $region15: #{tpu_custom_call.1} parent=0 // pred_check_branch
    %195 = sbr.rel (0) target = $region17
  $region16: #{tpu_custom_call.1} parent=0 // pred_region
    _
  $region17: #{tpu_custom_call.1} parent=0 // pred_fallthru
    _

</llo_original>
